<compile_context>
chip_gen: v5e
topology: v5e:2x2
jax: 0.10.0
libtpu: 0.0.40
codegen_flags: <defaults>
</compile_context>

<pallas_src>
import functools

import jax
import jax.numpy as jnp
from jax import lax
from jax.experimental import pallas as pl
from jax.experimental.pallas import tpu as pltpu

EPS = 1e-5


def _round_up(v, m):
    return (v + m - 1) // m * m


def _resblock_kernel(x_ref, w1_ref, w2_ref, bn_ref, out_ref, *, height, width):
    """Whole residual block, single grid step, fully VMEM-resident.

    x_ref  : (N, C_pad, H*W)   f32  input, channels zero-padded to the 8-row f32 sublane tile
    w1_ref : (C_pad, 9*C_pad)  bf16 conv1 weight (rows >= C are zero so conv2 taps stay aligned)
    w2_ref : (C,     9*C_pad)  bf16 conv2 weight
    bn_ref : (C_pad, 4)        f32  columns = [gamma1, beta1, gamma2, beta2]
    out_ref: (N, C, H*W)       f32
    """
    n_batch, c_pad, hw = x_ref.shape
    c_out = out_ref.shape[1]

    w1 = w1_ref[...]                                           # hoisted: read weights once
    w2 = w2_ref[...]
    g1, b1 = bn_ref[:, 0:1], bn_ref[:, 1:2]                    # (c_pad, 1)
    g2, b2 = bn_ref[:c_out, 2:3], bn_ref[:c_out, 3:4]          # (c_out, 1)

    # 3x3 tap boundary masks generated in-kernel from a lane iota (no HBM mask input).
    q = lax.broadcasted_iota(jnp.int32, (1, hw), 1)            # flat pixel index on lanes
    if width & (width - 1) == 0:                               # power-of-two W: shift / and
        hh, ww = q >> (width.bit_length() - 1), q & (width - 1)
    else:
        hh = q // width
        ww = q - hh * width
    offs, masks = [], []
    for dh in (-1, 0, 1):
        for dw in (-1, 0, 1):                                  # tap order matches weight packing
            offs.append(dh * width + dw)
            if dh == 0 and dw == 0:
                masks.append(None)                             # centre tap: no roll, no mask
            else:
                valid = ((hh + dh >= 0) & (hh + dh < height) &
                         (ww + dw >= 0) & (ww + dw < width))
                masks.append(valid.astype(jnp.float32))        # (1, hw)

    def conv3x3(y, w_mat):
        # im2col: each tap is a static lane roll (out[p] = y[p + off], boundary-masked); the
        # 9 taps stack along sublanes (8-row-aligned pieces) and contract in ONE bf16 MXU
        # matmul with f32 accumulation.
        taps = [y if m is None else pltpu.roll(y, (-off) % hw, axis=1) * m
                for off, m in zip(offs, masks)]
        stack = jnp.concatenate(taps, axis=0).astype(jnp.bfloat16)        # (9*c_pad, hw)
        return lax.dot_general(w_mat, stack, (((1,), (0,)), ((), ())),
                               preferred_element_type=jnp.float32)

    def bn_train(ys, g, b):
        # Training-mode BN: statistics pooled over the whole batch (list of per-image slabs),
        # biased variance, centered two-pass form, folded scale/shift FMA.
        inv = 1.0 / (n_batch * hw)
        mean = sum(jnp.sum(y, axis=1, keepdims=True) for y in ys) * inv
        cen = [y - mean for y in ys]
        var = sum(jnp.sum(c * c, axis=1, keepdims=True) for c in cen) * inv
        sc = g * lax.rsqrt(var + EPS)
        return [c * sc + b for c in cen]

    # conv1 -> bn1 -> relu      (per-image im2col matmul, batch-pooled BN stats)
    y1 = [jnp.maximum(y, 0.0) for y in
          bn_train([conv3x3(x_ref[n], w1) for n in range(n_batch)], g1, b1)]
    # conv2 -> bn2 -> residual add -> relu
    y2 = bn_train([conv3x3(y, w2) for y in y1], g2, b2)
    for n in range(n_batch):
        res = x_ref[n, :c_out, :]                              # re-read x here for the residual
        out_ref[n] = jnp.maximum(y2[n] + res, 0.0).astype(out_ref.dtype)

    # TODO(synk): running_mean / running_var updates (training-mode side effect) are not
    # materialized; only the forward activation is reproduced.
    # TODO(synk): at real ResNet shapes, add a P-axis grid (blocks >= 512 lanes,
    # dimension_semantics=('parallel',...), explicit vmem_limit_bytes for v7x's 64 MiB VMEM),
    # halo handling for the rolled taps, a cross-tile reduction for the BN batch statistics,
    # and prefer per-tap MXU accumulation over the 9x tap stack on v7x (MRB accumulate,
    # smaller VMEM footprint).


def _pack_conv_weight(w_oihw, c_in_pad, c_out_pad):
    """(O, I, 3, 3) -> (c_out_pad, 9*c_in_pad) bf16; column block t = kh*3+kw holds W[:,:,kh,kw]."""
    o, i, kh, kw = w_oihw.shape
    w = jnp.transpose(w_oihw.astype(jnp.float32), (0, 2, 3, 1))           # (O, KH, KW, I)
    w = jnp.pad(w, ((0, c_out_pad - o), (0, 0), (0, 0), (0, c_in_pad - i)))
    return w.reshape(c_out_pad, kh * kw * c_in_pad).astype(jnp.bfloat16)


def residual_block(x_nchw, w1_oihw, w2_oihw, g1, b1, g2, b2):
    """PyTorch layouts (NCHW input, OIHW weights) in, NCHW out; all compute in the kernel."""
    n, c, h, w = x_nchw.shape
    c_out = w1_oihw.shape[0]
    assert c_out == c, "residual add requires in_channels == out_channels"
    hw = h * w
    c_pad = _round_up(c, 8)          # f32 sublane tile; no-op at real ResNet widths

    # (N, C, H*W) is a free reshape of NCHW -- no HBM transpose on input or output.
    x_k = x_nchw.astype(jnp.float32).reshape(n, c, hw)
    if c_pad != c:
        x_k = jnp.pad(x_k, ((0, 0), (0, c_pad - c), (0, 0)))

    # conv1 keeps c_pad output rows (zero weight rows, zero gamma/beta) so the padded channels
    # stay exactly zero and conv2's sublane tap stack stays 8-row aligned.
    w1_p = _pack_conv_weight(w1_oihw, c_in_pad=c_pad, c_out_pad=c_pad)    # (c_pad, 9*c_pad) bf16
    w2_p = _pack_conv_weight(w2_oihw, c_in_pad=c_pad, c_out_pad=c)        # (c,     9*c_pad) bf16

    bn = jnp.stack([g1, b1, g2, b2], axis=1).astype(jnp.float32)          # (c, 4)
    if c_pad != c:
        bn = jnp.pad(bn, ((0, c_pad - c), (0, 0)))                        # padded rows: g=b=0

    vmem = pl.BlockSpec(memory_space=pltpu.MemorySpace.VMEM)
    out = pl.pallas_call(
        functools.partial(_resblock_kernel, height=h, width=w),
        out_shape=jax.ShapeDtypeStruct((n, c, hw), jnp.float32),          # lane-dense (last dim 256)
        in_specs=[vmem] * 4,
        out_specs=vmem,
    )(x_k, w1_p, w2_p, bn)

    return out.reshape(n, c, h, w)                                        # free reshape back to NCHW


def _reference(x_nchw, w1_oihw, w2_oihw, g1, b1, g2, b2, conv_dtype=jnp.float32):
    """Pure-JAX (XLA) reference; conv_dtype selects the conv operand precision."""
    x = jnp.transpose(x_nchw, (0, 2, 3, 1)).astype(jnp.float32)
    k1 = jnp.transpose(w1_oihw, (2, 3, 1, 0)).astype(jnp.float32)
    k2 = jnp.transpose(w2_oihw, (2, 3, 1, 0)).astype(jnp.float32)
    dn = ('NHWC', 'HWIO', 'NHWC')

    def conv(a, k):
        return lax.conv_general_dilated(a.astype(conv_dtype), k.astype(conv_dtype),
                                        (1, 1), 'SAME', dimension_numbers=dn,
                                        preferred_element_type=jnp.float32)

    def bn(y, g, b):
        m = jnp.mean(y, axis=(0, 1, 2), keepdims=True)
        v = jnp.mean((y - m) ** 2, axis=(0, 1, 2), keepdims=True)
        return (y - m) * lax.rsqrt(v + EPS) * g.reshape(1, 1, 1, -1) + b.reshape(1, 1, 1, -1)

    y = jnp.maximum(bn(conv(x, k1), g1, b1), 0.0)
    y = bn(conv(y, k2), g2, b2)
    y = jnp.maximum(y + x, 0.0)
    return jnp.transpose(y, (0, 3, 1, 2))


if __name__ == "__main__":
    key = jax.random.PRNGKey(0)
    k = jax.random.split(key, 7)

    # Small shapes implied by the module: in_channels == out_channels so the residual works.
    N, C, H, W = 2, 4, 16, 16
    x = jax.random.normal(k[0], (N, C, H, W), jnp.float32)

    w1 = 0.2 * jax.random.normal(k[1], (C, C, 3, 3), jnp.float32)   # conv1.weight (O,I,KH,KW)
    w2 = 0.2 * jax.random.normal(k[2], (C, C, 3, 3), jnp.float32)   # conv2.weight
    g1 = 1.0 + 0.1 * jax.random.normal(k[3], (C,), jnp.float32)     # bn1.weight
    b1 = 0.1 * jax.random.normal(k[4], (C,), jnp.float32)           # bn1.bias
    g2 = 1.0 + 0.1 * jax.random.normal(k[5], (C,), jnp.float32)     # bn2.weight
    b2 = 0.1 * jax.random.normal(k[6], (C,), jnp.float32)           # bn2.bias

    run = jax.jit(residual_block)
    out = jax.block_until_ready(run(x, w1, w2, g1, b1, g2, b2))
    assert out.shape == (N, C, H, W) and out.dtype == jnp.float32

    # Tight check vs a reference that mirrors the kernel's MXU precision (bf16 conv operands,
    # f32 accumulation); loose sanity check vs the full-f32 PyTorch-semantics reference
    # (tolerance accounts for bf16 operand rounding in the two convolutions).
    ref_bf16 = jax.block_until_ready(_reference(x, w1, w2, g1, b1, g2, b2, jnp.bfloat16))
    ref_f32 = jax.block_until_ready(_reference(x, w1, w2, g1, b1, g2, b2, jnp.float32))
    assert jnp.allclose(out, ref_bf16, rtol=2e-3, atol=2e-3), "mismatch vs bf16-operand reference"
    assert jnp.allclose(out, ref_f32, rtol=3e-2, atol=3e-2), "mismatch vs f32 reference"

    print("KERNEL_OK")
</pallas_src>

<mosaic_0001>
module attributes {stable_mosaic.version = 11 : i64} {
  func.func @_resblock_kernel(%arg0: memref<2x8x256xf32, #tpu.memory_space<vmem>>, %arg1: memref<8x72xbf16, #tpu.memory_space<vmem>>, %arg2: memref<4x72xbf16, #tpu.memory_space<vmem>>, %arg3: memref<8x4xf32, #tpu.memory_space<vmem>>, %arg4: memref<2x4x256xf32, #tpu.memory_space<vmem>>) attributes {dimension_semantics = [], scalar_prefetch = 0 : i64, scratch_operands = 0 : i64, tpu.core_type = #tpu.core_type<tc>} {
    %c0 = arith.constant 0 : index
    %c0_0 = arith.constant 0 : index
    %0 = vector.load %arg1[%c0, %c0_0] : memref<8x72xbf16, #tpu.memory_space<vmem>>, vector<8x72xbf16>
    %c0_1 = arith.constant 0 : index
    %c0_2 = arith.constant 0 : index
    %1 = vector.load %arg2[%c0_1, %c0_2] : memref<4x72xbf16, #tpu.memory_space<vmem>>, vector<4x72xbf16>
    %c0_3 = arith.constant 0 : index
    %c0_4 = arith.constant 0 : index
    %2 = vector.load %arg3[%c0_3, %c0_4] : memref<8x4xf32, #tpu.memory_space<vmem>>, vector<8x1xf32>
    %c0_5 = arith.constant 0 : index
    %c1 = arith.constant 1 : index
    %3 = vector.load %arg3[%c0_5, %c1] : memref<8x4xf32, #tpu.memory_space<vmem>>, vector<8x1xf32>
    %c0_6 = arith.constant 0 : index
    %c2 = arith.constant 2 : index
    %4 = vector.load %arg3[%c0_6, %c2] : memref<8x4xf32, #tpu.memory_space<vmem>>, vector<4x1xf32>
    %c0_7 = arith.constant 0 : index
    %c3 = arith.constant 3 : index
    %5 = vector.load %arg3[%c0_7, %c3] : memref<8x4xf32, #tpu.memory_space<vmem>>, vector<4x1xf32>
    %6 = tpu.iota {dimensions = array<i32: 1>} : vector<1x256xi32>
    %c4_i32 = arith.constant 4 : i32
    %7 = vector.broadcast %c4_i32 : i32 to vector<1x256xi32>
    %8 = arith.shrsi %6, %7 : vector<1x256xi32>
    %c15_i32 = arith.constant 15 : i32
    %9 = vector.broadcast %c15_i32 : i32 to vector<1x256xi32>
    %10 = arith.andi %6, %9 : vector<1x256xi32>
    %c-1_i32 = arith.constant -1 : i32
    %11 = vector.broadcast %c-1_i32 : i32 to vector<1x256xi32>
    %12 = arith.addi %8, %11 : vector<1x256xi32>
    %c0_i32 = arith.constant 0 : i32
    %13 = vector.broadcast %c0_i32 : i32 to vector<1x256xi32>
    %14 = arith.cmpi sge, %12, %13 : vector<1x256xi32>
    %c-1_i32_8 = arith.constant -1 : i32
    %15 = vector.broadcast %c-1_i32_8 : i32 to vector<1x256xi32>
    %16 = arith.addi %8, %15 : vector<1x256xi32>
    %c16_i32 = arith.constant 16 : i32
    %17 = vector.broadcast %c16_i32 : i32 to vector<1x256xi32>
    %18 = arith.cmpi slt, %16, %17 : vector<1x256xi32>
    %19 = arith.andi %14, %18 : vector<1x256xi1>
    %c-1_i32_9 = arith.constant -1 : i32
    %20 = vector.broadcast %c-1_i32_9 : i32 to vector<1x256xi32>
    %21 = arith.addi %10, %20 : vector<1x256xi32>
    %c0_i32_10 = arith.constant 0 : i32
    %22 = vector.broadcast %c0_i32_10 : i32 to vector<1x256xi32>
    %23 = arith.cmpi sge, %21, %22 : vector<1x256xi32>
    %24 = arith.andi %19, %23 : vector<1x256xi1>
    %c-1_i32_11 = arith.constant -1 : i32
    %25 = vector.broadcast %c-1_i32_11 : i32 to vector<1x256xi32>
    %26 = arith.addi %10, %25 : vector<1x256xi32>
    %c16_i32_12 = arith.constant 16 : i32
    %27 = vector.broadcast %c16_i32_12 : i32 to vector<1x256xi32>
    %28 = arith.cmpi slt, %26, %27 : vector<1x256xi32>
    %29 = arith.andi %24, %28 : vector<1x256xi1>
    %30 = arith.extui %29 : vector<1x256xi1> to vector<1x256xi32>
    %31 = arith.sitofp %30 : vector<1x256xi32> to vector<1x256xf32>
    %c-1_i32_13 = arith.constant -1 : i32
    %32 = vector.broadcast %c-1_i32_13 : i32 to vector<1x256xi32>
    %33 = arith.addi %8, %32 : vector<1x256xi32>
    %c0_i32_14 = arith.constant 0 : i32
    %34 = vector.broadcast %c0_i32_14 : i32 to vector<1x256xi32>
    %35 = arith.cmpi sge, %33, %34 : vector<1x256xi32>
    %c-1_i32_15 = arith.constant -1 : i32
    %36 = vector.broadcast %c-1_i32_15 : i32 to vector<1x256xi32>
    %37 = arith.addi %8, %36 : vector<1x256xi32>
    %c16_i32_16 = arith.constant 16 : i32
    %38 = vector.broadcast %c16_i32_16 : i32 to vector<1x256xi32>
    %39 = arith.cmpi slt, %37, %38 : vector<1x256xi32>
    %40 = arith.andi %35, %39 : vector<1x256xi1>
    %c0_i32_17 = arith.constant 0 : i32
    %41 = vector.broadcast %c0_i32_17 : i32 to vector<1x256xi32>
    %42 = arith.addi %10, %41 : vector<1x256xi32>
    %c0_i32_18 = arith.constant 0 : i32
    %43 = vector.broadcast %c0_i32_18 : i32 to vector<1x256xi32>
    %44 = arith.cmpi sge, %42, %43 : vector<1x256xi32>
    %45 = arith.andi %40, %44 : vector<1x256xi1>
    %c0_i32_19 = arith.constant 0 : i32
    %46 = vector.broadcast %c0_i32_19 : i32 to vector<1x256xi32>
    %47 = arith.addi %10, %46 : vector<1x256xi32>
    %c16_i32_20 = arith.constant 16 : i32
    %48 = vector.broadcast %c16_i32_20 : i32 to vector<1x256xi32>
    %49 = arith.cmpi slt, %47, %48 : vector<1x256xi32>
    %50 = arith.andi %45, %49 : vector<1x256xi1>
    %51 = arith.extui %50 : vector<1x256xi1> to vector<1x256xi32>
    %52 = arith.sitofp %51 : vector<1x256xi32> to vector<1x256xf32>
    %c-1_i32_21 = arith.constant -1 : i32
    %53 = vector.broadcast %c-1_i32_21 : i32 to vector<1x256xi32>
    %54 = arith.addi %8, %53 : vector<1x256xi32>
    %c0_i32_22 = arith.constant 0 : i32
    %55 = vector.broadcast %c0_i32_22 : i32 to vector<1x256xi32>
    %56 = arith.cmpi sge, %54, %55 : vector<1x256xi32>
    %c-1_i32_23 = arith.constant -1 : i32
    %57 = vector.broadcast %c-1_i32_23 : i32 to vector<1x256xi32>
    %58 = arith.addi %8, %57 : vector<1x256xi32>
    %c16_i32_24 = arith.constant 16 : i32
    %59 = vector.broadcast %c16_i32_24 : i32 to vector<1x256xi32>
    %60 = arith.cmpi slt, %58, %59 : vector<1x256xi32>
    %61 = arith.andi %56, %60 : vector<1x256xi1>
    %c1_i32 = arith.constant 1 : i32
    %62 = vector.broadcast %c1_i32 : i32 to vector<1x256xi32>
    %63 = arith.addi %10, %62 : vector<1x256xi32>
    %c0_i32_25 = arith.constant 0 : i32
    %64 = vector.broadcast %c0_i32_25 : i32 to vector<1x256xi32>
    %65 = arith.cmpi sge, %63, %64 : vector<1x256xi32>
    %66 = arith.andi %61, %65 : vector<1x256xi1>
    %c1_i32_26 = arith.constant 1 : i32
    %67 = vector.broadcast %c1_i32_26 : i32 to vector<1x256xi32>
    %68 = arith.addi %10, %67 : vector<1x256xi32>
    %c16_i32_27 = arith.constant 16 : i32
    %69 = vector.broadcast %c16_i32_27 : i32 to vector<1x256xi32>
    %70 = arith.cmpi slt, %68, %69 : vector<1x256xi32>
    %71 = arith.andi %66, %70 : vector<1x256xi1>
    %72 = arith.extui %71 : vector<1x256xi1> to vector<1x256xi32>
    %73 = arith.sitofp %72 : vector<1x256xi32> to vector<1x256xf32>
    %c0_i32_28 = arith.constant 0 : i32
    %74 = vector.broadcast %c0_i32_28 : i32 to vector<1x256xi32>
    %75 = arith.addi %8, %74 : vector<1x256xi32>
    %c0_i32_29 = arith.constant 0 : i32
    %76 = vector.broadcast %c0_i32_29 : i32 to vector<1x256xi32>
    %77 = arith.cmpi sge, %75, %76 : vector<1x256xi32>
    %c0_i32_30 = arith.constant 0 : i32
    %78 = vector.broadcast %c0_i32_30 : i32 to vector<1x256xi32>
    %79 = arith.addi %8, %78 : vector<1x256xi32>
    %c16_i32_31 = arith.constant 16 : i32
    %80 = vector.broadcast %c16_i32_31 : i32 to vector<1x256xi32>
    %81 = arith.cmpi slt, %79, %80 : vector<1x256xi32>
    %82 = arith.andi %77, %81 : vector<1x256xi1>
    %c-1_i32_32 = arith.constant -1 : i32
    %83 = vector.broadcast %c-1_i32_32 : i32 to vector<1x256xi32>
    %84 = arith.addi %10, %83 : vector<1x256xi32>
    %c0_i32_33 = arith.constant 0 : i32
    %85 = vector.broadcast %c0_i32_33 : i32 to vector<1x256xi32>
    %86 = arith.cmpi sge, %84, %85 : vector<1x256xi32>
    %87 = arith.andi %82, %86 : vector<1x256xi1>
    %c-1_i32_34 = arith.constant -1 : i32
    %88 = vector.broadcast %c-1_i32_34 : i32 to vector<1x256xi32>
    %89 = arith.addi %10, %88 : vector<1x256xi32>
    %c16_i32_35 = arith.constant 16 : i32
    %90 = vector.broadcast %c16_i32_35 : i32 to vector<1x256xi32>
    %91 = arith.cmpi slt, %89, %90 : vector<1x256xi32>
    %92 = arith.andi %87, %91 : vector<1x256xi1>
    %93 = arith.extui %92 : vector<1x256xi1> to vector<1x256xi32>
    %94 = arith.sitofp %93 : vector<1x256xi32> to vector<1x256xf32>
    %c0_i32_36 = arith.constant 0 : i32
    %95 = vector.broadcast %c0_i32_36 : i32 to vector<1x256xi32>
    %96 = arith.addi %8, %95 : vector<1x256xi32>
    %c0_i32_37 = arith.constant 0 : i32
    %97 = vector.broadcast %c0_i32_37 : i32 to vector<1x256xi32>
    %98 = arith.cmpi sge, %96, %97 : vector<1x256xi32>
    %c0_i32_38 = arith.constant 0 : i32
    %99 = vector.broadcast %c0_i32_38 : i32 to vector<1x256xi32>
    %100 = arith.addi %8, %99 : vector<1x256xi32>
    %c16_i32_39 = arith.constant 16 : i32
    %101 = vector.broadcast %c16_i32_39 : i32 to vector<1x256xi32>
    %102 = arith.cmpi slt, %100, %101 : vector<1x256xi32>
    %103 = arith.andi %98, %102 : vector<1x256xi1>
    %c1_i32_40 = arith.constant 1 : i32
    %104 = vector.broadcast %c1_i32_40 : i32 to vector<1x256xi32>
    %105 = arith.addi %10, %104 : vector<1x256xi32>
    %c0_i32_41 = arith.constant 0 : i32
    %106 = vector.broadcast %c0_i32_41 : i32 to vector<1x256xi32>
    %107 = arith.cmpi sge, %105, %106 : vector<1x256xi32>
    %108 = arith.andi %103, %107 : vector<1x256xi1>
    %c1_i32_42 = arith.constant 1 : i32
    %109 = vector.broadcast %c1_i32_42 : i32 to vector<1x256xi32>
    %110 = arith.addi %10, %109 : vector<1x256xi32>
    %c16_i32_43 = arith.constant 16 : i32
    %111 = vector.broadcast %c16_i32_43 : i32 to vector<1x256xi32>
    %112 = arith.cmpi slt, %110, %111 : vector<1x256xi32>
    %113 = arith.andi %108, %112 : vector<1x256xi1>
    %114 = arith.extui %113 : vector<1x256xi1> to vector<1x256xi32>
    %115 = arith.sitofp %114 : vector<1x256xi32> to vector<1x256xf32>
    %c1_i32_44 = arith.constant 1 : i32
    %116 = vector.broadcast %c1_i32_44 : i32 to vector<1x256xi32>
    %117 = arith.addi %8, %116 : vector<1x256xi32>
    %c0_i32_45 = arith.constant 0 : i32
    %118 = vector.broadcast %c0_i32_45 : i32 to vector<1x256xi32>
    %119 = arith.cmpi sge, %117, %118 : vector<1x256xi32>
    %c1_i32_46 = arith.constant 1 : i32
    %120 = vector.broadcast %c1_i32_46 : i32 to vector<1x256xi32>
    %121 = arith.addi %8, %120 : vector<1x256xi32>
    %c16_i32_47 = arith.constant 16 : i32
    %122 = vector.broadcast %c16_i32_47 : i32 to vector<1x256xi32>
    %123 = arith.cmpi slt, %121, %122 : vector<1x256xi32>
    %124 = arith.andi %119, %123 : vector<1x256xi1>
    %c-1_i32_48 = arith.constant -1 : i32
    %125 = vector.broadcast %c-1_i32_48 : i32 to vector<1x256xi32>
    %126 = arith.addi %10, %125 : vector<1x256xi32>
    %c0_i32_49 = arith.constant 0 : i32
    %127 = vector.broadcast %c0_i32_49 : i32 to vector<1x256xi32>
    %128 = arith.cmpi sge, %126, %127 : vector<1x256xi32>
    %129 = arith.andi %124, %128 : vector<1x256xi1>
    %c-1_i32_50 = arith.constant -1 : i32
    %130 = vector.broadcast %c-1_i32_50 : i32 to vector<1x256xi32>
    %131 = arith.addi %10, %130 : vector<1x256xi32>
    %c16_i32_51 = arith.constant 16 : i32
    %132 = vector.broadcast %c16_i32_51 : i32 to vector<1x256xi32>
    %133 = arith.cmpi slt, %131, %132 : vector<1x256xi32>
    %134 = arith.andi %129, %133 : vector<1x256xi1>
    %135 = arith.extui %134 : vector<1x256xi1> to vector<1x256xi32>
    %136 = arith.sitofp %135 : vector<1x256xi32> to vector<1x256xf32>
    %c1_i32_52 = arith.constant 1 : i32
    %137 = vector.broadcast %c1_i32_52 : i32 to vector<1x256xi32>
    %138 = arith.addi %8, %137 : vector<1x256xi32>
    %c0_i32_53 = arith.constant 0 : i32
    %139 = vector.broadcast %c0_i32_53 : i32 to vector<1x256xi32>
    %140 = arith.cmpi sge, %138, %139 : vector<1x256xi32>
    %c1_i32_54 = arith.constant 1 : i32
    %141 = vector.broadcast %c1_i32_54 : i32 to vector<1x256xi32>
    %142 = arith.addi %8, %141 : vector<1x256xi32>
    %c16_i32_55 = arith.constant 16 : i32
    %143 = vector.broadcast %c16_i32_55 : i32 to vector<1x256xi32>
    %144 = arith.cmpi slt, %142, %143 : vector<1x256xi32>
    %145 = arith.andi %140, %144 : vector<1x256xi1>
    %c0_i32_56 = arith.constant 0 : i32
    %146 = vector.broadcast %c0_i32_56 : i32 to vector<1x256xi32>
    %147 = arith.addi %10, %146 : vector<1x256xi32>
    %c0_i32_57 = arith.constant 0 : i32
    %148 = vector.broadcast %c0_i32_57 : i32 to vector<1x256xi32>
    %149 = arith.cmpi sge, %147, %148 : vector<1x256xi32>
    %150 = arith.andi %145, %149 : vector<1x256xi1>
    %c0_i32_58 = arith.constant 0 : i32
    %151 = vector.broadcast %c0_i32_58 : i32 to vector<1x256xi32>
    %152 = arith.addi %10, %151 : vector<1x256xi32>
    %c16_i32_59 = arith.constant 16 : i32
    %153 = vector.broadcast %c16_i32_59 : i32 to vector<1x256xi32>
    %154 = arith.cmpi slt, %152, %153 : vector<1x256xi32>
    %155 = arith.andi %150, %154 : vector<1x256xi1>
    %156 = arith.extui %155 : vector<1x256xi1> to vector<1x256xi32>
    %157 = arith.sitofp %156 : vector<1x256xi32> to vector<1x256xf32>
    %c1_i32_60 = arith.constant 1 : i32
    %158 = vector.broadcast %c1_i32_60 : i32 to vector<1x256xi32>
    %159 = arith.addi %8, %158 : vector<1x256xi32>
    %c0_i32_61 = arith.constant 0 : i32
    %160 = vector.broadcast %c0_i32_61 : i32 to vector<1x256xi32>
    %161 = arith.cmpi sge, %159, %160 : vector<1x256xi32>
    %c1_i32_62 = arith.constant 1 : i32
    %162 = vector.broadcast %c1_i32_62 : i32 to vector<1x256xi32>
    %163 = arith.addi %8, %162 : vector<1x256xi32>
    %c16_i32_63 = arith.constant 16 : i32
    %164 = vector.broadcast %c16_i32_63 : i32 to vector<1x256xi32>
    %165 = arith.cmpi slt, %163, %164 : vector<1x256xi32>
    %166 = arith.andi %161, %165 : vector<1x256xi1>
    %c1_i32_64 = arith.constant 1 : i32
    %167 = vector.broadcast %c1_i32_64 : i32 to vector<1x256xi32>
    %168 = arith.addi %10, %167 : vector<1x256xi32>
    %c0_i32_65 = arith.constant 0 : i32
    %169 = vector.broadcast %c0_i32_65 : i32 to vector<1x256xi32>
    %170 = arith.cmpi sge, %168, %169 : vector<1x256xi32>
    %171 = arith.andi %166, %170 : vector<1x256xi1>
    %c1_i32_66 = arith.constant 1 : i32
    %172 = vector.broadcast %c1_i32_66 : i32 to vector<1x256xi32>
    %173 = arith.addi %10, %172 : vector<1x256xi32>
    %c16_i32_67 = arith.constant 16 : i32
    %174 = vector.broadcast %c16_i32_67 : i32 to vector<1x256xi32>
    %175 = arith.cmpi slt, %173, %174 : vector<1x256xi32>
    %176 = arith.andi %171, %175 : vector<1x256xi1>
    %177 = arith.extui %176 : vector<1x256xi1> to vector<1x256xi32>
    %178 = arith.sitofp %177 : vector<1x256xi32> to vector<1x256xf32>
    %c0_68 = arith.constant 0 : index
    %c0_69 = arith.constant 0 : index
    %c0_70 = arith.constant 0 : index
    %179 = vector.load %arg0[%c0_68, %c0_69, %c0_70] : memref<2x8x256xf32, #tpu.memory_space<vmem>>, vector<1x8x256xf32>
    %180 = vector.shape_cast %179 : vector<1x8x256xf32> to vector<8x256xf32>
    %c17_i32 = arith.constant 17 : i32
    %181 = tpu.dynamic_rotate %180 by %c17_i32 dim 1 : vector<8x256xf32>, i32 -> vector<8x256xf32>
    %182 = vector.broadcast %31 : vector<1x256xf32> to vector<8x256xf32>
    %183 = arith.mulf %181, %182 : vector<8x256xf32>
    %c16_i32_71 = arith.constant 16 : i32
    %184 = tpu.dynamic_rotate %180 by %c16_i32_71 dim 1 : vector<8x256xf32>, i32 -> vector<8x256xf32>
    %185 = vector.broadcast %52 : vector<1x256xf32> to vector<8x256xf32>
    %186 = arith.mulf %184, %185 : vector<8x256xf32>
    %c15_i32_72 = arith.constant 15 : i32
    %187 = tpu.dynamic_rotate %180 by %c15_i32_72 dim 1 : vector<8x256xf32>, i32 -> vector<8x256xf32>
    %188 = vector.broadcast %73 : vector<1x256xf32> to vector<8x256xf32>
    %189 = arith.mulf %187, %188 : vector<8x256xf32>
    %c1_i32_73 = arith.constant 1 : i32
    %190 = tpu.dynamic_rotate %180 by %c1_i32_73 dim 1 : vector<8x256xf32>, i32 -> vector<8x256xf32>
    %191 = vector.broadcast %94 : vector<1x256xf32> to vector<8x256xf32>
    %192 = arith.mulf %190, %191 : vector<8x256xf32>
    %c255_i32 = arith.constant 255 : i32
    %193 = tpu.dynamic_rotate %180 by %c255_i32 dim 1 : vector<8x256xf32>, i32 -> vector<8x256xf32>
    %194 = vector.broadcast %115 : vector<1x256xf32> to vector<8x256xf32>
    %195 = arith.mulf %193, %194 : vector<8x256xf32>
    %c241_i32 = arith.constant 241 : i32
    %196 = tpu.dynamic_rotate %180 by %c241_i32 dim 1 : vector<8x256xf32>, i32 -> vector<8x256xf32>
    %197 = vector.broadcast %136 : vector<1x256xf32> to vector<8x256xf32>
    %198 = arith.mulf %196, %197 : vector<8x256xf32>
    %c240_i32 = arith.constant 240 : i32
    %199 = tpu.dynamic_rotate %180 by %c240_i32 dim 1 : vector<8x256xf32>, i32 -> vector<8x256xf32>
    %200 = vector.broadcast %157 : vector<1x256xf32> to vector<8x256xf32>
    %201 = arith.mulf %199, %200 : vector<8x256xf32>
    %c239_i32 = arith.constant 239 : i32
    %202 = tpu.dynamic_rotate %180 by %c239_i32 dim 1 : vector<8x256xf32>, i32 -> vector<8x256xf32>
    %203 = vector.broadcast %178 : vector<1x256xf32> to vector<8x256xf32>
    %204 = arith.mulf %202, %203 : vector<8x256xf32>
    %205 = tpu.concatenate %183, %186, %189, %192, %180, %195, %198, %201, %204 in 0 : vector<8x256xf32>, vector<8x256xf32>, vector<8x256xf32>, vector<8x256xf32>, vector<8x256xf32>, vector<8x256xf32>, vector<8x256xf32>, vector<8x256xf32>, vector<8x256xf32> -> vector<72x256xf32>
    %206 = arith.truncf %205 : vector<72x256xf32> to vector<72x256xbf16>
    %cst = arith.constant dense<0.000000e+00> : vector<8x256xf32>
    %207 = tpu.matmul %0, %206, %cst {dimension_numbers = #tpu.dot_dimension_numbers<[1], [0], [0], [1], [0, 0, 1, 1], [], []>} : vector<8x72xbf16>, vector<72x256xbf16>, vector<8x256xf32> -> vector<8x256xf32>
    %c1_74 = arith.constant 1 : index
    %c0_75 = arith.constant 0 : index
    %c0_76 = arith.constant 0 : index
    %208 = vector.load %arg0[%c1_74, %c0_75, %c0_76] : memref<2x8x256xf32, #tpu.memory_space<vmem>>, vector<1x8x256xf32>
    %209 = vector.shape_cast %208 : vector<1x8x256xf32> to vector<8x256xf32>
    %c17_i32_77 = arith.constant 17 : i32
    %210 = tpu.dynamic_rotate %209 by %c17_i32_77 dim 1 : vector<8x256xf32>, i32 -> vector<8x256xf32>
    %211 = vector.broadcast %31 : vector<1x256xf32> to vector<8x256xf32>
    %212 = arith.mulf %210, %211 : vector<8x256xf32>
    %c16_i32_78 = arith.constant 16 : i32
    %213 = tpu.dynamic_rotate %209 by %c16_i32_78 dim 1 : vector<8x256xf32>, i32 -> vector<8x256xf32>
    %214 = vector.broadcast %52 : vector<1x256xf32> to vector<8x256xf32>
    %215 = arith.mulf %213, %214 : vector<8x256xf32>
    %c15_i32_79 = arith.constant 15 : i32
    %216 = tpu.dynamic_rotate %209 by %c15_i32_79 dim 1 : vector<8x256xf32>, i32 -> vector<8x256xf32>
    %217 = vector.broadcast %73 : vector<1x256xf32> to vector<8x256xf32>
    %218 = arith.mulf %216, %217 : vector<8x256xf32>
    %c1_i32_80 = arith.constant 1 : i32
    %219 = tpu.dynamic_rotate %209 by %c1_i32_80 dim 1 : vector<8x256xf32>, i32 -> vector<8x256xf32>
    %220 = vector.broadcast %94 : vector<1x256xf32> to vector<8x256xf32>
    %221 = arith.mulf %219, %220 : vector<8x256xf32>
    %c255_i32_81 = arith.constant 255 : i32
    %222 = tpu.dynamic_rotate %209 by %c255_i32_81 dim 1 : vector<8x256xf32>, i32 -> vector<8x256xf32>
    %223 = vector.broadcast %115 : vector<1x256xf32> to vector<8x256xf32>
    %224 = arith.mulf %222, %223 : vector<8x256xf32>
    %c241_i32_82 = arith.constant 241 : i32
    %225 = tpu.dynamic_rotate %209 by %c241_i32_82 dim 1 : vector<8x256xf32>, i32 -> vector<8x256xf32>
    %226 = vector.broadcast %136 : vector<1x256xf32> to vector<8x256xf32>
    %227 = arith.mulf %225, %226 : vector<8x256xf32>
    %c240_i32_83 = arith.constant 240 : i32
    %228 = tpu.dynamic_rotate %209 by %c240_i32_83 dim 1 : vector<8x256xf32>, i32 -> vector<8x256xf32>
    %229 = vector.broadcast %157 : vector<1x256xf32> to vector<8x256xf32>
    %230 = arith.mulf %228, %229 : vector<8x256xf32>
    %c239_i32_84 = arith.constant 239 : i32
    %231 = tpu.dynamic_rotate %209 by %c239_i32_84 dim 1 : vector<8x256xf32>, i32 -> vector<8x256xf32>
    %232 = vector.broadcast %178 : vector<1x256xf32> to vector<8x256xf32>
    %233 = arith.mulf %231, %232 : vector<8x256xf32>
    %234 = tpu.concatenate %212, %215, %218, %221, %209, %224, %227, %230, %233 in 0 : vector<8x256xf32>, vector<8x256xf32>, vector<8x256xf32>, vector<8x256xf32>, vector<8x256xf32>, vector<8x256xf32>, vector<8x256xf32>, vector<8x256xf32>, vector<8x256xf32> -> vector<72x256xf32>
    %235 = arith.truncf %234 : vector<72x256xf32> to vector<72x256xbf16>
    %cst_85 = arith.constant dense<0.000000e+00> : vector<8x256xf32>
    %236 = tpu.matmul %0, %235, %cst_85 {dimension_numbers = #tpu.dot_dimension_numbers<[1], [0], [0], [1], [0, 0, 1, 1], [], []>} : vector<8x72xbf16>, vector<72x256xbf16>, vector<8x256xf32> -> vector<8x256xf32>
    %cst_86 = arith.constant dense<0.000000e+00> : vector<8xf32>
    %237 = vector.multi_reduction <add>, %207, %cst_86 [1] : vector<8x256xf32> to vector<8xf32>
    %238 = vector.shape_cast %237 : vector<8xf32> to vector<8x1xf32>
    %cst_87 = arith.constant 0.000000e+00 : f32
    %239 = vector.broadcast %cst_87 : f32 to vector<8x1xf32>
    %240 = arith.addf %239, %238 : vector<8x1xf32>
    %cst_88 = arith.constant dense<0.000000e+00> : vector<8xf32>
    %241 = vector.multi_reduction <add>, %236, %cst_88 [1] : vector<8x256xf32> to vector<8xf32>
    %242 = vector.shape_cast %241 : vector<8xf32> to vector<8x1xf32>
    %243 = arith.addf %240, %242 : vector<8x1xf32>
    %cst_89 = arith.constant 0.001953125 : f32
    %244 = vector.broadcast %cst_89 : f32 to vector<8x1xf32>
    %245 = arith.mulf %243, %244 : vector<8x1xf32>
    %246 = vector.broadcast %245 : vector<8x1xf32> to vector<8x256xf32>
    %247 = arith.subf %207, %246 : vector<8x256xf32>
    %248 = vector.broadcast %245 : vector<8x1xf32> to vector<8x256xf32>
    %249 = arith.subf %236, %248 : vector<8x256xf32>
    %250 = arith.mulf %247, %247 : vector<8x256xf32>
    %cst_90 = arith.constant dense<0.000000e+00> : vector<8xf32>
    %251 = vector.multi_reduction <add>, %250, %cst_90 [1] : vector<8x256xf32> to vector<8xf32>
    %252 = vector.shape_cast %251 : vector<8xf32> to vector<8x1xf32>
    %cst_91 = arith.constant 0.000000e+00 : f32
    %253 = vector.broadcast %cst_91 : f32 to vector<8x1xf32>
    %254 = arith.addf %253, %252 : vector<8x1xf32>
    %255 = arith.mulf %249, %249 : vector<8x256xf32>
    %cst_92 = arith.constant dense<0.000000e+00> : vector<8xf32>
    %256 = vector.multi_reduction <add>, %255, %cst_92 [1] : vector<8x256xf32> to vector<8xf32>
    %257 = vector.shape_cast %256 : vector<8xf32> to vector<8x1xf32>
    %258 = arith.addf %254, %257 : vector<8x1xf32>
    %cst_93 = arith.constant 0.001953125 : f32
    %259 = vector.broadcast %cst_93 : f32 to vector<8x1xf32>
    %260 = arith.mulf %258, %259 : vector<8x1xf32>
    %cst_94 = arith.constant 9.99999974E-6 : f32
    %261 = vector.broadcast %cst_94 : f32 to vector<8x1xf32>
    %262 = arith.addf %260, %261 : vector<8x1xf32>
    %263 = math.rsqrt %262 : vector<8x1xf32>
    %264 = arith.mulf %2, %263 : vector<8x1xf32>
    %265 = vector.broadcast %264 : vector<8x1xf32> to vector<8x256xf32>
    %266 = arith.mulf %247, %265 : vector<8x256xf32>
    %267 = vector.broadcast %3 : vector<8x1xf32> to vector<8x256xf32>
    %268 = arith.addf %266, %267 : vector<8x256xf32>
    %269 = vector.broadcast %264 : vector<8x1xf32> to vector<8x256xf32>
    %270 = arith.mulf %249, %269 : vector<8x256xf32>
    %271 = vector.broadcast %3 : vector<8x1xf32> to vector<8x256xf32>
    %272 = arith.addf %270, %271 : vector<8x256xf32>
    %cst_95 = arith.constant 0.000000e+00 : f32
    %273 = vector.broadcast %cst_95 : f32 to vector<8x256xf32>
    %274 = arith.maximumf %268, %273 : vector<8x256xf32>
    %cst_96 = arith.constant 0.000000e+00 : f32
    %275 = vector.broadcast %cst_96 : f32 to vector<8x256xf32>
    %276 = arith.maximumf %272, %275 : vector<8x256xf32>
    %c17_i32_97 = arith.constant 17 : i32
    %277 = tpu.dynamic_rotate %274 by %c17_i32_97 dim 1 : vector<8x256xf32>, i32 -> vector<8x256xf32>
    %278 = vector.broadcast %31 : vector<1x256xf32> to vector<8x256xf32>
    %279 = arith.mulf %277, %278 : vector<8x256xf32>
    %c16_i32_98 = arith.constant 16 : i32
    %280 = tpu.dynamic_rotate %274 by %c16_i32_98 dim 1 : vector<8x256xf32>, i32 -> vector<8x256xf32>
    %281 = vector.broadcast %52 : vector<1x256xf32> to vector<8x256xf32>
    %282 = arith.mulf %280, %281 : vector<8x256xf32>
    %c15_i32_99 = arith.constant 15 : i32
    %283 = tpu.dynamic_rotate %274 by %c15_i32_99 dim 1 : vector<8x256xf32>, i32 -> vector<8x256xf32>
    %284 = vector.broadcast %73 : vector<1x256xf32> to vector<8x256xf32>
    %285 = arith.mulf %283, %284 : vector<8x256xf32>
    %c1_i32_100 = arith.constant 1 : i32
    %286 = tpu.dynamic_rotate %274 by %c1_i32_100 dim 1 : vector<8x256xf32>, i32 -> vector<8x256xf32>
    %287 = vector.broadcast %94 : vector<1x256xf32> to vector<8x256xf32>
    %288 = arith.mulf %286, %287 : vector<8x256xf32>
    %c255_i32_101 = arith.constant 255 : i32
    %289 = tpu.dynamic_rotate %274 by %c255_i32_101 dim 1 : vector<8x256xf32>, i32 -> vector<8x256xf32>
    %290 = vector.broadcast %115 : vector<1x256xf32> to vector<8x256xf32>
    %291 = arith.mulf %289, %290 : vector<8x256xf32>
    %c241_i32_102 = arith.constant 241 : i32
    %292 = tpu.dynamic_rotate %274 by %c241_i32_102 dim 1 : vector<8x256xf32>, i32 -> vector<8x256xf32>
    %293 = vector.broadcast %136 : vector<1x256xf32> to vector<8x256xf32>
    %294 = arith.mulf %292, %293 : vector<8x256xf32>
    %c240_i32_103 = arith.constant 240 : i32
    %295 = tpu.dynamic_rotate %274 by %c240_i32_103 dim 1 : vector<8x256xf32>, i32 -> vector<8x256xf32>
    %296 = vector.broadcast %157 : vector<1x256xf32> to vector<8x256xf32>
    %297 = arith.mulf %295, %296 : vector<8x256xf32>
    %c239_i32_104 = arith.constant 239 : i32
    %298 = tpu.dynamic_rotate %274 by %c239_i32_104 dim 1 : vector<8x256xf32>, i32 -> vector<8x256xf32>
    %299 = vector.broadcast %178 : vector<1x256xf32> to vector<8x256xf32>
    %300 = arith.mulf %298, %299 : vector<8x256xf32>
    %301 = tpu.concatenate %279, %282, %285, %288, %274, %291, %294, %297, %300 in 0 : vector<8x256xf32>, vector<8x256xf32>, vector<8x256xf32>, vector<8x256xf32>, vector<8x256xf32>, vector<8x256xf32>, vector<8x256xf32>, vector<8x256xf32>, vector<8x256xf32> -> vector<72x256xf32>
    %302 = arith.truncf %301 : vector<72x256xf32> to vector<72x256xbf16>
    %cst_105 = arith.constant dense<0.000000e+00> : vector<4x256xf32>
    %303 = tpu.matmul %1, %302, %cst_105 {dimension_numbers = #tpu.dot_dimension_numbers<[1], [0], [0], [1], [0, 0, 1, 1], [], []>} : vector<4x72xbf16>, vector<72x256xbf16>, vector<4x256xf32> -> vector<4x256xf32>
    %c17_i32_106 = arith.constant 17 : i32
    %304 = tpu.dynamic_rotate %276 by %c17_i32_106 dim 1 : vector<8x256xf32>, i32 -> vector<8x256xf32>
    %305 = vector.broadcast %31 : vector<1x256xf32> to vector<8x256xf32>
    %306 = arith.mulf %304, %305 : vector<8x256xf32>
    %c16_i32_107 = arith.constant 16 : i32
    %307 = tpu.dynamic_rotate %276 by %c16_i32_107 dim 1 : vector<8x256xf32>, i32 -> vector<8x256xf32>
    %308 = vector.broadcast %52 : vector<1x256xf32> to vector<8x256xf32>
    %309 = arith.mulf %307, %308 : vector<8x256xf32>
    %c15_i32_108 = arith.constant 15 : i32
    %310 = tpu.dynamic_rotate %276 by %c15_i32_108 dim 1 : vector<8x256xf32>, i32 -> vector<8x256xf32>
    %311 = vector.broadcast %73 : vector<1x256xf32> to vector<8x256xf32>
    %312 = arith.mulf %310, %311 : vector<8x256xf32>
    %c1_i32_109 = arith.constant 1 : i32
    %313 = tpu.dynamic_rotate %276 by %c1_i32_109 dim 1 : vector<8x256xf32>, i32 -> vector<8x256xf32>
    %314 = vector.broadcast %94 : vector<1x256xf32> to vector<8x256xf32>
    %315 = arith.mulf %313, %314 : vector<8x256xf32>
    %c255_i32_110 = arith.constant 255 : i32
    %316 = tpu.dynamic_rotate %276 by %c255_i32_110 dim 1 : vector<8x256xf32>, i32 -> vector<8x256xf32>
    %317 = vector.broadcast %115 : vector<1x256xf32> to vector<8x256xf32>
    %318 = arith.mulf %316, %317 : vector<8x256xf32>
    %c241_i32_111 = arith.constant 241 : i32
    %319 = tpu.dynamic_rotate %276 by %c241_i32_111 dim 1 : vector<8x256xf32>, i32 -> vector<8x256xf32>
    %320 = vector.broadcast %136 : vector<1x256xf32> to vector<8x256xf32>
    %321 = arith.mulf %319, %320 : vector<8x256xf32>
    %c240_i32_112 = arith.constant 240 : i32
    %322 = tpu.dynamic_rotate %276 by %c240_i32_112 dim 1 : vector<8x256xf32>, i32 -> vector<8x256xf32>
    %323 = vector.broadcast %157 : vector<1x256xf32> to vector<8x256xf32>
    %324 = arith.mulf %322, %323 : vector<8x256xf32>
    %c239_i32_113 = arith.constant 239 : i32
    %325 = tpu.dynamic_rotate %276 by %c239_i32_113 dim 1 : vector<8x256xf32>, i32 -> vector<8x256xf32>
    %326 = vector.broadcast %178 : vector<1x256xf32> to vector<8x256xf32>
    %327 = arith.mulf %325, %326 : vector<8x256xf32>
    %328 = tpu.concatenate %306, %309, %312, %315, %276, %318, %321, %324, %327 in 0 : vector<8x256xf32>, vector<8x256xf32>, vector<8x256xf32>, vector<8x256xf32>, vector<8x256xf32>, vector<8x256xf32>, vector<8x256xf32>, vector<8x256xf32>, vector<8x256xf32> -> vector<72x256xf32>
    %329 = arith.truncf %328 : vector<72x256xf32> to vector<72x256xbf16>
    %cst_114 = arith.constant dense<0.000000e+00> : vector<4x256xf32>
    %330 = tpu.matmul %1, %329, %cst_114 {dimension_numbers = #tpu.dot_dimension_numbers<[1], [0], [0], [1], [0, 0, 1, 1], [], []>} : vector<4x72xbf16>, vector<72x256xbf16>, vector<4x256xf32> -> vector<4x256xf32>
    %cst_115 = arith.constant dense<0.000000e+00> : vector<4xf32>
    %331 = vector.multi_reduction <add>, %303, %cst_115 [1] : vector<4x256xf32> to vector<4xf32>
    %332 = vector.shape_cast %331 : vector<4xf32> to vector<4x1xf32>
    %cst_116 = arith.constant 0.000000e+00 : f32
    %333 = vector.broadcast %cst_116 : f32 to vector<4x1xf32>
    %334 = arith.addf %333, %332 : vector<4x1xf32>
    %cst_117 = arith.constant dense<0.000000e+00> : vector<4xf32>
    %335 = vector.multi_reduction <add>, %330, %cst_117 [1] : vector<4x256xf32> to vector<4xf32>
    %336 = vector.shape_cast %335 : vector<4xf32> to vector<4x1xf32>
    %337 = arith.addf %334, %336 : vector<4x1xf32>
    %cst_118 = arith.constant 0.001953125 : f32
    %338 = vector.broadcast %cst_118 : f32 to vector<4x1xf32>
    %339 = arith.mulf %337, %338 : vector<4x1xf32>
    %340 = vector.broadcast %339 : vector<4x1xf32> to vector<4x256xf32>
    %341 = arith.subf %303, %340 : vector<4x256xf32>
    %342 = vector.broadcast %339 : vector<4x1xf32> to vector<4x256xf32>
    %343 = arith.subf %330, %342 : vector<4x256xf32>
    %344 = arith.mulf %341, %341 : vector<4x256xf32>
    %cst_119 = arith.constant dense<0.000000e+00> : vector<4xf32>
    %345 = vector.multi_reduction <add>, %344, %cst_119 [1] : vector<4x256xf32> to vector<4xf32>
    %346 = vector.shape_cast %345 : vector<4xf32> to vector<4x1xf32>
    %cst_120 = arith.constant 0.000000e+00 : f32
    %347 = vector.broadcast %cst_120 : f32 to vector<4x1xf32>
    %348 = arith.addf %347, %346 : vector<4x1xf32>
    %349 = arith.mulf %343, %343 : vector<4x256xf32>
    %cst_121 = arith.constant dense<0.000000e+00> : vector<4xf32>
    %350 = vector.multi_reduction <add>, %349, %cst_121 [1] : vector<4x256xf32> to vector<4xf32>
    %351 = vector.shape_cast %350 : vector<4xf32> to vector<4x1xf32>
    %352 = arith.addf %348, %351 : vector<4x1xf32>
    %cst_122 = arith.constant 0.001953125 : f32
    %353 = vector.broadcast %cst_122 : f32 to vector<4x1xf32>
    %354 = arith.mulf %352, %353 : vector<4x1xf32>
    %cst_123 = arith.constant 9.99999974E-6 : f32
    %355 = vector.broadcast %cst_123 : f32 to vector<4x1xf32>
    %356 = arith.addf %354, %355 : vector<4x1xf32>
    %357 = math.rsqrt %356 : vector<4x1xf32>
    %358 = arith.mulf %4, %357 : vector<4x1xf32>
    %359 = vector.broadcast %358 : vector<4x1xf32> to vector<4x256xf32>
    %360 = arith.mulf %341, %359 : vector<4x256xf32>
    %361 = vector.broadcast %5 : vector<4x1xf32> to vector<4x256xf32>
    %362 = arith.addf %360, %361 : vector<4x256xf32>
    %363 = vector.broadcast %358 : vector<4x1xf32> to vector<4x256xf32>
    %364 = arith.mulf %343, %363 : vector<4x256xf32>
    %365 = vector.broadcast %5 : vector<4x1xf32> to vector<4x256xf32>
    %366 = arith.addf %364, %365 : vector<4x256xf32>
    %c0_124 = arith.constant 0 : index
    %c0_125 = arith.constant 0 : index
    %c0_126 = arith.constant 0 : index
    %367 = vector.load %arg0[%c0_124, %c0_125, %c0_126] : memref<2x8x256xf32, #tpu.memory_space<vmem>>, vector<1x4x256xf32>
    %368 = vector.shape_cast %367 : vector<1x4x256xf32> to vector<4x256xf32>
    %369 = arith.addf %362, %368 : vector<4x256xf32>
    %cst_127 = arith.constant 0.000000e+00 : f32
    %370 = vector.broadcast %cst_127 : f32 to vector<4x256xf32>
    %371 = arith.maximumf %369, %370 : vector<4x256xf32>
    %c0_128 = arith.constant 0 : index
    %c0_129 = arith.constant 0 : index
    %c0_130 = arith.constant 0 : index
    %372 = vector.load %arg4[%c0_128, %c0_129, %c0_130] : memref<2x4x256xf32, #tpu.memory_space<vmem>>, vector<1x4x256xf32>
    %373 = vector.shape_cast %372 : vector<1x4x256xf32> to vector<4x256xf32>
    %374 = vector.shape_cast %371 : vector<4x256xf32> to vector<1x4x256xf32>
    tpu.vector_store %arg4[%c0_128, %c0_129, %c0_130], %374 {strides = array<i32>} : memref<2x4x256xf32, #tpu.memory_space<vmem>>, vector<1x4x256xf32>,
    %c1_131 = arith.constant 1 : index
    %c0_132 = arith.constant 0 : index
    %c0_133 = arith.constant 0 : index
    %375 = vector.load %arg0[%c1_131, %c0_132, %c0_133] : memref<2x8x256xf32, #tpu.memory_space<vmem>>, vector<1x4x256xf32>
    %376 = vector.shape_cast %375 : vector<1x4x256xf32> to vector<4x256xf32>
    %377 = arith.addf %366, %376 : vector<4x256xf32>
    %cst_134 = arith.constant 0.000000e+00 : f32
    %378 = vector.broadcast %cst_134 : f32 to vector<4x256xf32>
    %379 = arith.maximumf %377, %378 : vector<4x256xf32>
    %c1_135 = arith.constant 1 : index
    %c0_136 = arith.constant 0 : index
    %c0_137 = arith.constant 0 : index
    %380 = vector.load %arg4[%c1_135, %c0_136, %c0_137] : memref<2x4x256xf32, #tpu.memory_space<vmem>>, vector<1x4x256xf32>
    %381 = vector.shape_cast %380 : vector<1x4x256xf32> to vector<4x256xf32>
    %382 = vector.shape_cast %379 : vector<4x256xf32> to vector<1x4x256xf32>
    tpu.vector_store %arg4[%c1_135, %c0_136, %c0_137], %382 {strides = array<i32>} : memref<2x4x256xf32, #tpu.memory_space<vmem>>, vector<1x4x256xf32>,
    return
  }
}

</mosaic_0001>

<llo_original>
// kernel: residual_block.1
$region0: #{residual_block.1}
  #allocation0 [shape = 'u32[]', space=smem, size = 0x4, offset = 0x4, fixed_abs, tag = 'smem constant byte address 0x4 - core index']
  #allocation1 [shape = 'u32[72,128]{1,0:T(1,128)}', space=vmem, size = 0x9000, scoped, tag = 'internal scratch']
  %s0 = inlined_call_operand.vmem [shape: f32[2,8,256], index: 0, kind: input, shape index: {}]
  %s1 = inlined_call_operand.vmem [shape: bf16[8,72], index: 1, kind: input, shape index: {}]
  %s2 = inlined_call_operand.vmem [shape: bf16[4,72], index: 2, kind: input, shape index: {}]
  %s3 = inlined_call_operand.vmem [shape: f32[8,4], index: 3, kind: input, shape index: {}]
  %s4 = inlined_call_operand.vmem [shape: f32[2,4,256], index: 4, kind: output, shape index: {}]
  %s5 = sld [smem:[#allocation0]]
  $region26: #{residual_block.1} parent=0
    _
  %s7 = ssub.s32 1, %s5
  %s8 = scalar_select 0, %s7, %s5
  // Predicated region
  $region2: #{residual_block.1} parent=0 // pred_check
    _
  $region3: #{residual_block.1} parent=0 // pred_check_branch
    %10 = sbr.rel (0) target = $region5
  $region4: #{residual_block.1} parent=0 // pred_region
    _
  $region5: #{residual_block.1} parent=0 // pred_fallthru
    _
  // Predicated region
  $region6: #{residual_block.1} parent=0 // pred_check
    _
  $region7: #{residual_block.1} parent=0 // pred_check_branch
    %12 = sbr.rel (0) target = $region9
  $region8: #{residual_block.1} parent=0 // pred_region
    _
  $region9: #{residual_block.1} parent=0 // pred_fallthru
    _
  // Predicated region
  $region10: #{residual_block.1} parent=0 // pred_check
    _
  $region11: #{residual_block.1} parent=0 // pred_check_branch
    %14 = sbr.rel (0) target = $region13
  $region12: #{residual_block.1} parent=0 // pred_region
    _
  $region13: #{residual_block.1} parent=0 // pred_fallthru
    _
  // Predicated region
  $region14: #{residual_block.1} parent=0 // pred_check
    _
  $region15: #{residual_block.1} parent=0 // pred_check_branch
    %16 = sbr.rel (0) target = $region17
  $region16: #{residual_block.1} parent=0 // pred_region
    _
  $region17: #{residual_block.1} parent=0 // pred_fallthru
    _
  %v18 = vld [vmem:[%s1] sm:$0xf]
  %v19 = vld [vmem:[%s2] sm:$0x3]
  %v20 = vld [vmem:[%s3] sm:$0xff]
  %v21 = vld [vmem:[%s3] sm:$0xf]
  %v22 = vlaneseq
  %v23 = vand.u32 %v22, 127
  %v24 = vadd.s32 %v23, 128
  %v25 = vshra.s32 %v23, 4
  %v26 = vshra.s32 %v24, 4
  %v27 = vand.u32 %v23, 15
  %v28 = vand.u32 %v24, 15
  %v29 = vadd.s32 %v25, 4294967295
  %v30 = vadd.s32 %v26, 4294967295
  %vm31 = vcmp.ge.s32.totalorder %v29, 0
  %vm32 = vcmp.ge.s32.totalorder %v30, 0
  %vm33 = vcmp.lt.s32.totalorder %v29, 16
  %vm34 = vcmp.lt.s32.totalorder %v30, 16
  %vm35 = vmand %vm31, %vm33
  %vm36 = vmand %vm32, %vm34
  %v37 = vadd.s32 %v27, 4294967295
  %v38 = vadd.s32 %v28, 4294967295
  %vm39 = vcmp.ge.s32.totalorder %v37, 0
  %vm40 = vcmp.ge.s32.totalorder %v38, 0
  %vm41 = vmand %vm35, %vm39
  %vm42 = vmand %vm36, %vm40
  %vm43 = vcmp.lt.s32.totalorder %v37, 16
  %vm44 = vcmp.lt.s32.totalorder %v38, 16
  %vm45 = vmand %vm41, %vm43
  %vm46 = vmand %vm42, %vm44
  %v47 = vsel %vm45, 1, 0
  %v48 = vsel %vm46, 1, 0
  %v49 = vcvt.s32.f32 %v47
  %v50 = vcvt.s32.f32 %v48
  %vm51 = vcmp.ge.s32.totalorder %v27, 0
  %vm52 = vcmp.ge.s32.totalorder %v28, 0
  %vm53 = vmand %vm35, %vm51
  %vm54 = vmand %vm36, %vm52
  %vm55 = vcmp.lt.s32.totalorder %v27, 16
  %vm56 = vcmp.lt.s32.totalorder %v28, 16
  %vm57 = vmand %vm53, %vm55
  %vm58 = vmand %vm54, %vm56
  %v59 = vsel %vm57, 1, 0
  %v60 = vsel %vm58, 1, 0
  %v61 = vcvt.s32.f32 %v59
  %v62 = vcvt.s32.f32 %v60
  %v63 = vadd.s32 %v27, 1
  %v64 = vadd.s32 %v28, 1
  %vm65 = vcmp.ge.s32.totalorder %v63, 0
  %vm66 = vcmp.ge.s32.totalorder %v64, 0
  %vm67 = vmand %vm35, %vm65
  %vm68 = vmand %vm36, %vm66
  %vm69 = vcmp.lt.s32.totalorder %v63, 16
  %vm70 = vcmp.lt.s32.totalorder %v64, 16
  %vm71 = vmand %vm67, %vm69
  %vm72 = vmand %vm68, %vm70
  %v73 = vsel %vm71, 1, 0
  %v74 = vsel %vm72, 1, 0
  %v75 = vcvt.s32.f32 %v73
  %v76 = vcvt.s32.f32 %v74
  %vm77 = vcmp.ge.s32.totalorder %v25, 0
  %vm78 = vcmp.ge.s32.totalorder %v26, 0
  %vm79 = vcmp.lt.s32.totalorder %v25, 16
  %vm80 = vcmp.lt.s32.totalorder %v26, 16
  %vm81 = vmand %vm77, %vm79
  %vm82 = vmand %vm78, %vm80
  %vm83 = vmand %vm81, %vm39
  %vm84 = vmand %vm82, %vm40
  %vm85 = vmand %vm83, %vm43
  %vm86 = vmand %vm84, %vm44
  %v87 = vsel %vm85, 1, 0
  %v88 = vsel %vm86, 1, 0
  %v89 = vcvt.s32.f32 %v87
  %v90 = vcvt.s32.f32 %v88
  %vm91 = vmand %vm81, %vm65
  %vm92 = vmand %vm82, %vm66
  %vm93 = vmand %vm91, %vm69
  %vm94 = vmand %vm92, %vm70
  %v95 = vsel %vm93, 1, 0
  %v96 = vsel %vm94, 1, 0
  %v97 = vcvt.s32.f32 %v95
  %v98 = vcvt.s32.f32 %v96
  %v99 = vadd.s32 %v25, 1
  %v100 = vadd.s32 %v26, 1
  %vm101 = vcmp.ge.s32.totalorder %v99, 0
  %vm102 = vcmp.ge.s32.totalorder %v100, 0
  %vm103 = vcmp.lt.s32.totalorder %v99, 16
  %vm104 = vcmp.lt.s32.totalorder %v100, 16
  %vm105 = vmand %vm101, %vm103
  %vm106 = vmand %vm102, %vm104
  %vm107 = vmand %vm105, %vm39
  %vm108 = vmand %vm106, %vm40
  %vm109 = vmand %vm107, %vm43
  %vm110 = vmand %vm108, %vm44
  %v111 = vsel %vm109, 1, 0
  %v112 = vsel %vm110, 1, 0
  %v113 = vcvt.s32.f32 %v111
  %v114 = vcvt.s32.f32 %v112
  %vm115 = vmand %vm105, %vm51
  %vm116 = vmand %vm106, %vm52
  %vm117 = vmand %vm115, %vm55
  %vm118 = vmand %vm116, %vm56
  %v119 = vsel %vm117, 1, 0
  %v120 = vsel %vm118, 1, 0
  %v121 = vcvt.s32.f32 %v119
  %v122 = vcvt.s32.f32 %v120
  %vm123 = vmand %vm105, %vm65
  %vm124 = vmand %vm106, %vm66
  %vm125 = vmand %vm123, %vm69
  %vm126 = vmand %vm124, %vm70
  %v127 = vsel %vm125, 1, 0
  %v128 = vsel %vm126, 1, 0
  %v129 = vcvt.s32.f32 %v127
  %v130 = vcvt.s32.f32 %v128
  %v131 = vld [vmem:[%s0] sm:$0xff]
  %v132 = vld [vmem:[%s0 + $0x8] sm:$0xff]
  %133 = vrot.lane.b32.xlu0 %v131, 17
  %v134 = vpop.permute.xlu0 %133
  %135 = vrot.lane.b32.xlu0 %v132, 17
  %v136 = vpop.permute.xlu0 %135
  %vm137 = vcmp.lt.s32.totalorder %v23, 17
  %v138 = vsel %vm137, %v134, %v136
  %v139 = vsel %vm137, %v136, %v134
  %v140 = vmul.f32 %v139, %v49
  %v141 = vmul.f32 %v138, %v50
  %142 = vrot.lane.b32.xlu0 %v131, 16
  %v143 = vpop.permute.xlu0 %142
  %144 = vrot.lane.b32.xlu0 %v132, 16
  %v145 = vpop.permute.xlu0 %144
  %vm146 = vcmp.lt.s32.totalorder %v23, 16
  %v147 = vsel %vm146, %v143, %v145
  %v148 = vsel %vm146, %v145, %v143
  %v149 = vmul.f32 %v148, %v61
  %v150 = vmul.f32 %v147, %v62
  %151 = vrot.lane.b32.xlu0 %v131, 15
  %v152 = vpop.permute.xlu0 %151
  %153 = vrot.lane.b32.xlu0 %v132, 15
  %v154 = vpop.permute.xlu0 %153
  %vm155 = vcmp.lt.s32.totalorder %v23, 15
  %v156 = vsel %vm155, %v152, %v154
  %v157 = vsel %vm155, %v154, %v152
  %v158 = vmul.f32 %v157, %v75
  %v159 = vmul.f32 %v156, %v76
  %160 = vrot.lane.b32.xlu0 %v131, 1
  %v161 = vpop.permute.xlu0 %160
  %162 = vrot.lane.b32.xlu0 %v132, 1
  %v163 = vpop.permute.xlu0 %162
  %vm164 = vcmp.lt.s32.totalorder %v23, 1
  %v165 = vsel %vm164, %v161, %v163
  %v166 = vsel %vm164, %v163, %v161
  %v167 = vmul.f32 %v166, %v89
  %v168 = vmul.f32 %v165, %v90
  %169 = vrot.lane.b32.xlu0 %v131, 127
  %v170 = vpop.permute.xlu0 %169
  %171 = vrot.lane.b32.xlu0 %v132, 127
  %v172 = vpop.permute.xlu0 %171
  %vm173 = vcmp.lt.s32.totalorder %v23, 127
  %v174 = vsel %vm173, %v170, %v172
  %v175 = vsel %vm173, %v172, %v170
  %v176 = vmul.f32 %v174, %v97
  %v177 = vmul.f32 %v175, %v98
  %178 = vrot.lane.b32.xlu0 %v131, 113
  %v179 = vpop.permute.xlu0 %178
  %180 = vrot.lane.b32.xlu0 %v132, 113
  %v181 = vpop.permute.xlu0 %180
  %vm182 = vcmp.lt.s32.totalorder %v23, 113
  %v183 = vsel %vm182, %v179, %v181
  %v184 = vsel %vm182, %v181, %v179
  %v185 = vmul.f32 %v183, %v113
  %v186 = vmul.f32 %v184, %v114
  %187 = vrot.lane.b32.xlu0 %v131, 112
  %v188 = vpop.permute.xlu0 %187
  %189 = vrot.lane.b32.xlu0 %v132, 112
  %v190 = vpop.permute.xlu0 %189
  %vm191 = vcmp.lt.s32.totalorder %v23, 112
  %v192 = vsel %vm191, %v188, %v190
  %v193 = vsel %vm191, %v190, %v188
  %v194 = vmul.f32 %v192, %v121
  %v195 = vmul.f32 %v193, %v122
  %196 = vrot.lane.b32.xlu0 %v131, 111
  %v197 = vpop.permute.xlu0 %196
  %198 = vrot.lane.b32.xlu0 %v132, 111
  %v199 = vpop.permute.xlu0 %198
  %vm200 = vcmp.lt.s32.totalorder %v23, 111
  %v201 = vsel %vm200, %v197, %v199
  %v202 = vsel %vm200, %v199, %v197
  %v203 = vmul.f32 %v201, %v129
  %v204 = vmul.f32 %v202, %v130
  %v205 = vpack.c.bf16 %v149, %v140
  %v206 = vpack.c.bf16 %v150, %v141
  %v207 = vpack.c.bf16 %v167, %v158
  %v208 = vpack.c.bf16 %v168, %v159
  %v209 = vpack.c.bf16 %v176, %v131
  %v210 = vpack.c.bf16 %v177, %v132
  %v211 = vpack.c.bf16 %v194, %v185
  %v212 = vpack.c.bf16 %v195, %v186
  %v213 = vpack.c.bf16 %v203, %v203
  %v214 = vpack.c.bf16 %v204, %v204
  %vm215 = vcmask 588800
  %v217 = vsel %vm215, %v18, 0
  %vm219 = vcmask 1043456
  %v221 = vsel %vm219, %v213, 0
  %v224 = vsel %vm219, %v214, 0
  %226 = vmatpush.bf16.msra.mxu0 0
  %227 = vmatpush.bf16.msra.mxu0 0
  %228 = vmatpush.bf16.msra.mxu0 0
  %229 = vmatpush.bf16.msra.mxu0 %v221
  %230 = vmatpush.bf16.msra.mxu0 %v211
  %231 = vmatpush.bf16.msra.mxu0 %v209
  %232 = vmatpush.bf16.msra.mxu0 %v207
  %233 = vmatpush.bf16.msra.mxu0 %v205
  %234 = vmatmul.bf16.gmra.mxu0 %v217
  %v235 = vpop.f32.mrf.mxu0
  %v236 = vadd.f32 0.0, %v235
  %v237 = vpop.f32.mrf.mxu0
  %238 = vdwg.mxu0
  %239 = vmatpush.bf16.msra.mxu0 0
  %240 = vmatpush.bf16.msra.mxu0 0
  %241 = vmatpush.bf16.msra.mxu0 0
  %242 = vmatpush.bf16.msra.mxu0 %v224
  %243 = vmatpush.bf16.msra.mxu0 %v212
  %244 = vmatpush.bf16.msra.mxu0 %v210
  %245 = vmatpush.bf16.msra.mxu0 %v208
  %246 = vmatpush.bf16.msra.mxu0 %v206
  %247 = vmatmul.bf16.gmra.mxu0 %v217
  %v248 = vpop.f32.mrf.mxu0
  %v249 = vadd.f32 0.0, %v248
  %v250 = vpop.f32.mrf.mxu0
  %251 = vdwg.mxu0
  %s252 = scalar_lea.vmem %s0, 16
  %v253 = vld [vmem:[%s252] sm:$0xff]
  %v254 = vld [vmem:[%s252 + $0x8] sm:$0xff]
  %255 = vrot.lane.b32.xlu0 %v253, 17
  %v256 = vpop.permute.xlu0 %255
  %257 = vrot.lane.b32.xlu0 %v254, 17
  %v258 = vpop.permute.xlu0 %257
  %v259 = vsel %vm137, %v256, %v258
  %v260 = vsel %vm137, %v258, %v256
  %v261 = vmul.f32 %v260, %v49
  %v262 = vmul.f32 %v259, %v50
  %263 = vrot.lane.b32.xlu0 %v253, 16
  %v264 = vpop.permute.xlu0 %263
  %265 = vrot.lane.b32.xlu0 %v254, 16
  %v266 = vpop.permute.xlu0 %265
  %v267 = vsel %vm146, %v264, %v266
  %v268 = vsel %vm146, %v266, %v264
  %v269 = vmul.f32 %v268, %v61
  %v270 = vmul.f32 %v267, %v62
  %271 = vrot.lane.b32.xlu0 %v253, 15
  %v272 = vpop.permute.xlu0 %271
  %273 = vrot.lane.b32.xlu0 %v254, 15
  %v274 = vpop.permute.xlu0 %273
  %v275 = vsel %vm155, %v272, %v274
  %v276 = vsel %vm155, %v274, %v272
  %v277 = vmul.f32 %v276, %v75
  %v278 = vmul.f32 %v275, %v76
  %279 = vrot.lane.b32.xlu0 %v253, 1
  %v280 = vpop.permute.xlu0 %279
  %281 = vrot.lane.b32.xlu0 %v254, 1
  %v282 = vpop.permute.xlu0 %281
  %v283 = vsel %vm164, %v280, %v282
  %v284 = vsel %vm164, %v282, %v280
  %v285 = vmul.f32 %v284, %v89
  %v286 = vmul.f32 %v283, %v90
  %287 = vrot.lane.b32.xlu0 %v253, 127
  %v288 = vpop.permute.xlu0 %287
  %289 = vrot.lane.b32.xlu0 %v254, 127
  %v290 = vpop.permute.xlu0 %289
  %v291 = vsel %vm173, %v288, %v290
  %v292 = vsel %vm173, %v290, %v288
  %v293 = vmul.f32 %v291, %v97
  %v294 = vmul.f32 %v292, %v98
  %295 = vrot.lane.b32.xlu0 %v253, 113
  %v296 = vpop.permute.xlu0 %295
  %297 = vrot.lane.b32.xlu0 %v254, 113
  %v298 = vpop.permute.xlu0 %297
  %v299 = vsel %vm182, %v296, %v298
  %v300 = vsel %vm182, %v298, %v296
  %v301 = vmul.f32 %v299, %v113
  %v302 = vmul.f32 %v300, %v114
  %303 = vrot.lane.b32.xlu0 %v253, 112
  %v304 = vpop.permute.xlu0 %303
  %305 = vrot.lane.b32.xlu0 %v254, 112
  %v306 = vpop.permute.xlu0 %305
  %v307 = vsel %vm191, %v304, %v306
  %v308 = vsel %vm191, %v306, %v304
  %v309 = vmul.f32 %v307, %v121
  %v310 = vmul.f32 %v308, %v122
  %311 = vrot.lane.b32.xlu0 %v253, 111
  %v312 = vpop.permute.xlu0 %311
  %313 = vrot.lane.b32.xlu0 %v254, 111
  %v314 = vpop.permute.xlu0 %313
  %v315 = vsel %vm200, %v312, %v314
  %v316 = vsel %vm200, %v314, %v312
  %v317 = vmul.f32 %v315, %v129
  %v318 = vmul.f32 %v316, %v130
  %v319 = vpack.c.bf16 %v269, %v261
  %v320 = vpack.c.bf16 %v270, %v262
  %v321 = vpack.c.bf16 %v285, %v277
  %v322 = vpack.c.bf16 %v286, %v278
  %v323 = vpack.c.bf16 %v293, %v253
  %v324 = vpack.c.bf16 %v294, %v254
  %v325 = vpack.c.bf16 %v309, %v301
  %v326 = vpack.c.bf16 %v310, %v302
  %v327 = vpack.c.bf16 %v317, %v317
  %v328 = vpack.c.bf16 %v318, %v318
  %v330 = vsel %vm219, %v327, 0
  %v333 = vsel %vm219, %v328, 0
  %335 = vmatpush.bf16.msra.mxu0 0
  %336 = vmatpush.bf16.msra.mxu0 0
  %337 = vmatpush.bf16.msra.mxu0 0
  %338 = vmatpush.bf16.msra.mxu0 %v330
  %339 = vmatpush.bf16.msra.mxu0 %v325
  %340 = vmatpush.bf16.msra.mxu0 %v323
  %341 = vmatpush.bf16.msra.mxu0 %v321
  %342 = vmatpush.bf16.msra.mxu0 %v319
  %343 = vmatmul.bf16.gmra.mxu0 %v217
  %v344 = vpop.f32.mrf.mxu0
  %v345 = vadd.f32 0.0, %v344
  %v346 = vpop.f32.mrf.mxu0
  %347 = vdwg.mxu0
  %348 = vmatpush.bf16.msra.mxu0 0
  %349 = vmatpush.bf16.msra.mxu0 0
  %350 = vmatpush.bf16.msra.mxu0 0
  %351 = vmatpush.bf16.msra.mxu0 %v333
  %352 = vmatpush.bf16.msra.mxu0 %v326
  %353 = vmatpush.bf16.msra.mxu0 %v324
  %354 = vmatpush.bf16.msra.mxu0 %v322
  %355 = vmatpush.bf16.msra.mxu0 %v320
  %356 = vmatmul.bf16.gmra.mxu0 %v217
  %v357 = vpop.f32.mrf.mxu0
  %v358 = vadd.f32 0.0, %v357
  %v359 = vpop.f32.mrf.mxu0
  %360 = vdwg.mxu0
  %v361 = vadd.f32 %v236, %v249
  %362 = vadd.xlane.f32.xlu0 %v361
  %v363 = vpop.xlane.xlu0 %362
  %v364 = vadd.f32 %v363, 0.0
  %v365 = vadd.f32 %v345, %v358
  %366 = vadd.xlane.f32.xlu0 %v365
  %v367 = vpop.xlane.xlu0 %366
  %v368 = vadd.f32 %v364, %v367
  %v369 = vmul.f32 %v368, 0.001953125
  %v370 = vsub.f32 %v236, %v369
  %v371 = vsub.f32 %v249, %v369
  %v372 = vsub.f32 %v345, %v369
  %v373 = vsub.f32 %v358, %v369
  %v374 = vmul.f32 %v370, %v370
  %v375 = vmul.f32 %v371, %v371
  %v376 = vadd.f32 %v374, %v375
  %377 = vadd.xlane.f32.xlu0 %v376
  %v378 = vpop.xlane.xlu0 %377
  %v379 = vadd.f32 %v378, 0.0
  %v380 = vmul.f32 %v372, %v372
  %v381 = vmul.f32 %v373, %v373
  %v382 = vadd.f32 %v380, %v381
  %383 = vadd.xlane.f32.xlu0 %v382
  %v384 = vpop.xlane.xlu0 %383
  %v385 = vadd.f32 %v379, %v384
  %v386 = vmul.f32 %v385, 0.001953125
  %v387 = vadd.f32 %v386, 1e-05
  %v388 = vrsqrt.pop %v387
  %v389 = vmul.f32 %v388, %v387
  %v390 = vmul.f32 %v389, %v388
  %v391 = vmul.f32 0.5, %v390
  %v392 = vsub.f32 1.5, %v391
  %v393 = vmul.f32 %v388, %v392
  %vm394 = vweird.f32 %v387
  %vm395 = vweird.f32 %v388
  %vm396 = vmor %vm394, %vm395
  %v397 = vsel %vm396, %v388, %v393
  %v398 = vmul.f32 %v20, %v397
  %400 = vset.pattern.permute.xlu0 0
  %401 = vperm.xlu0 %400, %v398
  %v402 = vpop.permute.xlu0 %401
  %v404 = vmul.f32 %v370, %v402
  %v405 = vmul.f32 %v371, %v402
  %407 = vset.pattern.permute.xlu0 1
  %408 = vperm.xlu0 %407, %v20
  %v409 = vpop.permute.xlu0 %408
  %v411 = vadd.f32 %v404, %v409
  %v412 = vadd.f32 %v405, %v409
  %v413 = vmul.f32 %v372, %v402
  %v414 = vmul.f32 %v373, %v402
  %v415 = vadd.f32 %v413, %v409
  %v416 = vadd.f32 %v414, %v409
  %v417 = vmax.f32 %v411, 0.0
  %v418 = vmax.f32 %v412, 0.0
  %v419 = vmax.f32 %v415, 0.0
  %v420 = vmax.f32 %v416, 0.0
  %421 = vrot.lane.b32.xlu0 %v417, 17
  %v422 = vpop.permute.xlu0 %421
  %423 = vrot.lane.b32.xlu0 %v418, 17
  %v424 = vpop.permute.xlu0 %423
  %v425 = vsel %vm137, %v422, %v424
  %v426 = vsel %vm137, %v424, %v422
  %v427 = vmul.f32 %v426, %v49
  %v428 = vmul.f32 %v425, %v50
  %429 = vrot.lane.b32.xlu0 %v417, 16
  %v430 = vpop.permute.xlu0 %429
  %431 = vrot.lane.b32.xlu0 %v418, 16
  %v432 = vpop.permute.xlu0 %431
  %v433 = vsel %vm146, %v430, %v432
  %v434 = vsel %vm146, %v432, %v430
  %v435 = vmul.f32 %v434, %v61
  %v436 = vmul.f32 %v433, %v62
  %437 = vrot.lane.b32.xlu0 %v417, 15
  %v438 = vpop.permute.xlu0 %437
  %439 = vrot.lane.b32.xlu0 %v418, 15
  %v440 = vpop.permute.xlu0 %439
  %v441 = vsel %vm155, %v438, %v440
  %v442 = vsel %vm155, %v440, %v438
  %v443 = vmul.f32 %v442, %v75
  %v444 = vmul.f32 %v441, %v76
  %445 = vrot.lane.b32.xlu0 %v417, 1
  %v446 = vpop.permute.xlu0 %445
  %447 = vrot.lane.b32.xlu0 %v418, 1
  %v448 = vpop.permute.xlu0 %447
  %v449 = vsel %vm164, %v446, %v448
  %v450 = vsel %vm164, %v448, %v446
  %v451 = vmul.f32 %v450, %v89
  %v452 = vmul.f32 %v449, %v90
  %453 = vrot.lane.b32.xlu0 %v417, 127
  %v454 = vpop.permute.xlu0 %453
  %455 = vrot.lane.b32.xlu0 %v418, 127
  %v456 = vpop.permute.xlu0 %455
  %v457 = vsel %vm173, %v454, %v456
  %v458 = vsel %vm173, %v456, %v454
  %v459 = vmul.f32 %v457, %v97
  %v460 = vmul.f32 %v458, %v98
  %461 = vrot.lane.b32.xlu0 %v417, 113
  %v462 = vpop.permute.xlu0 %461
  %463 = vrot.lane.b32.xlu0 %v418, 113
  %v464 = vpop.permute.xlu0 %463
  %v465 = vsel %vm182, %v462, %v464
  %v466 = vsel %vm182, %v464, %v462
  %v467 = vmul.f32 %v465, %v113
  %v468 = vmul.f32 %v466, %v114
  %469 = vrot.lane.b32.xlu0 %v417, 112
  %v470 = vpop.permute.xlu0 %469
  %471 = vrot.lane.b32.xlu0 %v418, 112
  %v472 = vpop.permute.xlu0 %471
  %v473 = vsel %vm191, %v470, %v472
  %v474 = vsel %vm191, %v472, %v470
  %v475 = vmul.f32 %v473, %v121
  %v476 = vmul.f32 %v474, %v122
  %477 = vrot.lane.b32.xlu0 %v417, 111
  %v478 = vpop.permute.xlu0 %477
  %479 = vrot.lane.b32.xlu0 %v418, 111
  %v480 = vpop.permute.xlu0 %479
  %v481 = vsel %vm200, %v478, %v480
  %v482 = vsel %vm200, %v480, %v478
  %v483 = vmul.f32 %v481, %v129
  %v484 = vmul.f32 %v482, %v130
  %v485 = vpack.c.bf16 %v435, %v427
  %v486 = vpack.c.bf16 %v436, %v428
  %v487 = vpack.c.bf16 %v451, %v443
  %v488 = vpack.c.bf16 %v452, %v444
  %v489 = vpack.c.bf16 %v459, %v417
  %v490 = vpack.c.bf16 %v460, %v418
  %v491 = vpack.c.bf16 %v475, %v467
  %v492 = vpack.c.bf16 %v476, %v468
  %v493 = vpack.c.bf16 %v483, %v483
  %v494 = vpack.c.bf16 %v484, %v484
  %v496 = vsel %vm215, %v19, 0
  %v499 = vsel %vm219, %v493, 0
  %v502 = vsel %vm219, %v494, 0
  %504 = vmatpush.bf16.msra.mxu0 0
  %505 = vmatpush.bf16.msra.mxu0 0
  %506 = vmatpush.bf16.msra.mxu0 0
  %507 = vmatpush.bf16.msra.mxu0 %v499
  %508 = vmatpush.bf16.msra.mxu0 %v491
  %509 = vmatpush.bf16.msra.mxu0 %v489
  %510 = vmatpush.bf16.msra.mxu0 %v487
  %511 = vmatpush.bf16.msra.mxu0 %v485
  %512 = vmatmul.bf16.gmra.mxu0 %v496
  %v513 = vpop.f32.mrf.mxu0
  %v514 = vadd.f32 0.0, %v513
  %v515 = vpop.f32.mrf.mxu0
  %516 = vdwg.mxu0
  %517 = vmatpush.bf16.msra.mxu0 0
  %518 = vmatpush.bf16.msra.mxu0 0
  %519 = vmatpush.bf16.msra.mxu0 0
  %520 = vmatpush.bf16.msra.mxu0 %v502
  %521 = vmatpush.bf16.msra.mxu0 %v492
  %522 = vmatpush.bf16.msra.mxu0 %v490
  %523 = vmatpush.bf16.msra.mxu0 %v488
  %524 = vmatpush.bf16.msra.mxu0 %v486
  %525 = vmatmul.bf16.gmra.mxu0 %v496
  %v526 = vpop.f32.mrf.mxu0
  %v527 = vadd.f32 0.0, %v526
  %v528 = vpop.f32.mrf.mxu0
  %529 = vdwg.mxu0
  %530 = vrot.lane.b32.xlu0 %v419, 17
  %v531 = vpop.permute.xlu0 %530
  %532 = vrot.lane.b32.xlu0 %v420, 17
  %v533 = vpop.permute.xlu0 %532
  %v534 = vsel %vm137, %v531, %v533
  %v535 = vsel %vm137, %v533, %v531
  %v536 = vmul.f32 %v535, %v49
  %v537 = vmul.f32 %v534, %v50
  %538 = vrot.lane.b32.xlu0 %v419, 16
  %v539 = vpop.permute.xlu0 %538
  %540 = vrot.lane.b32.xlu0 %v420, 16
  %v541 = vpop.permute.xlu0 %540
  %v542 = vsel %vm146, %v539, %v541
  %v543 = vsel %vm146, %v541, %v539
  %v544 = vmul.f32 %v543, %v61
  %v545 = vmul.f32 %v542, %v62
  %546 = vrot.lane.b32.xlu0 %v419, 15
  %v547 = vpop.permute.xlu0 %546
  %548 = vrot.lane.b32.xlu0 %v420, 15
  %v549 = vpop.permute.xlu0 %548
  %v550 = vsel %vm155, %v547, %v549
  %v551 = vsel %vm155, %v549, %v547
  %v552 = vmul.f32 %v551, %v75
  %v553 = vmul.f32 %v550, %v76
  %554 = vrot.lane.b32.xlu0 %v419, 1
  %v555 = vpop.permute.xlu0 %554
  %556 = vrot.lane.b32.xlu0 %v420, 1
  %v557 = vpop.permute.xlu0 %556
  %v558 = vsel %vm164, %v555, %v557
  %v559 = vsel %vm164, %v557, %v555
  %v560 = vmul.f32 %v559, %v89
  %v561 = vmul.f32 %v558, %v90
  %562 = vrot.lane.b32.xlu0 %v419, 127
  %v563 = vpop.permute.xlu0 %562
  %564 = vrot.lane.b32.xlu0 %v420, 127
  %v565 = vpop.permute.xlu0 %564
  %v566 = vsel %vm173, %v563, %v565
  %v567 = vsel %vm173, %v565, %v563
  %v568 = vmul.f32 %v566, %v97
  %v569 = vmul.f32 %v567, %v98
  %570 = vrot.lane.b32.xlu0 %v419, 113
  %v571 = vpop.permute.xlu0 %570
  %572 = vrot.lane.b32.xlu0 %v420, 113
  %v573 = vpop.permute.xlu0 %572
  %v574 = vsel %vm182, %v571, %v573
  %v575 = vsel %vm182, %v573, %v571
  %v576 = vmul.f32 %v574, %v113
  %v577 = vmul.f32 %v575, %v114
  %578 = vrot.lane.b32.xlu0 %v419, 112
  %v579 = vpop.permute.xlu0 %578
  %580 = vrot.lane.b32.xlu0 %v420, 112
  %v581 = vpop.permute.xlu0 %580
  %v582 = vsel %vm191, %v579, %v581
  %v583 = vsel %vm191, %v581, %v579
  %v584 = vmul.f32 %v582, %v121
  %v585 = vmul.f32 %v583, %v122
  %586 = vrot.lane.b32.xlu0 %v419, 111
  %v587 = vpop.permute.xlu0 %586
  %588 = vrot.lane.b32.xlu0 %v420, 111
  %v589 = vpop.permute.xlu0 %588
  %v590 = vsel %vm200, %v587, %v589
  %v591 = vsel %vm200, %v589, %v587
  %v592 = vmul.f32 %v590, %v129
  %v593 = vmul.f32 %v591, %v130
  %v594 = vpack.c.bf16 %v544, %v536
  %v595 = vpack.c.bf16 %v545, %v537
  %v596 = vpack.c.bf16 %v560, %v552
  %v597 = vpack.c.bf16 %v561, %v553
  %v598 = vpack.c.bf16 %v568, %v419
  %v599 = vpack.c.bf16 %v569, %v420
  %v600 = vpack.c.bf16 %v584, %v576
  %v601 = vpack.c.bf16 %v585, %v577
  %v602 = vpack.c.bf16 %v592, %v592
  %v603 = vpack.c.bf16 %v593, %v593
  %v605 = vsel %vm219, %v602, 0
  %v608 = vsel %vm219, %v603, 0
  %610 = vmatpush.bf16.msra.mxu0 0
  %611 = vmatpush.bf16.msra.mxu0 0
  %612 = vmatpush.bf16.msra.mxu0 0
  %613 = vmatpush.bf16.msra.mxu0 %v605
  %614 = vmatpush.bf16.msra.mxu0 %v600
  %615 = vmatpush.bf16.msra.mxu0 %v598
  %616 = vmatpush.bf16.msra.mxu0 %v596
  %617 = vmatpush.bf16.msra.mxu0 %v594
  %618 = vmatmul.bf16.gmra.mxu0 %v496
  %v619 = vpop.f32.mrf.mxu0
  %v620 = vadd.f32 0.0, %v619
  %v621 = vpop.f32.mrf.mxu0
  %622 = vdwg.mxu0
  %623 = vmatpush.bf16.msra.mxu0 0
  %624 = vmatpush.bf16.msra.mxu0 0
  %625 = vmatpush.bf16.msra.mxu0 0
  %626 = vmatpush.bf16.msra.mxu0 %v608
  %627 = vmatpush.bf16.msra.mxu0 %v601
  %628 = vmatpush.bf16.msra.mxu0 %v599
  %629 = vmatpush.bf16.msra.mxu0 %v597
  %630 = vmatpush.bf16.msra.mxu0 %v595
  %631 = vmatmul.bf16.gmra.mxu0 %v496
  %v632 = vpop.f32.mrf.mxu0
  %v633 = vadd.f32 0.0, %v632
  %v634 = vpop.f32.mrf.mxu0
  %635 = vdwg.mxu0
  %v636 = vsel %vm219, %v514, 0.0
  %v637 = vsel %vm219, %v527, 0.0
  %v638 = vadd.f32 %v636, %v637
  %639 = vadd.xlane.f32.xlu0 %v638
  %v640 = vpop.xlane.xlu0 %639
  %v641 = vadd.f32 %v640, 0.0
  %v642 = vsel %vm219, %v620, 0.0
  %v643 = vsel %vm219, %v633, 0.0
  %v644 = vadd.f32 %v642, %v643
  %645 = vadd.xlane.f32.xlu0 %v644
  %v646 = vpop.xlane.xlu0 %645
  %v647 = vadd.f32 %v641, %v646
  %v648 = vmul.f32 %v647, 0.001953125
  %v649 = vsub.f32 %v514, %v648
  %v650 = vsub.f32 %v527, %v648
  %v651 = vsub.f32 %v620, %v648
  %v652 = vsub.f32 %v633, %v648
  %v653 = vmul.f32 %v649, %v649
  %v654 = vmul.f32 %v650, %v650
  %v655 = vsel %vm219, %v653, 0.0
  %v656 = vsel %vm219, %v654, 0.0
  %v657 = vadd.f32 %v655, %v656
  %658 = vadd.xlane.f32.xlu0 %v657
  %v659 = vpop.xlane.xlu0 %658
  %v660 = vadd.f32 %v659, 0.0
  %v661 = vmul.f32 %v651, %v651
  %v662 = vmul.f32 %v652, %v652
  %v663 = vsel %vm219, %v661, 0.0
  %v664 = vsel %vm219, %v662, 0.0
  %v665 = vadd.f32 %v663, %v664
  %666 = vadd.xlane.f32.xlu0 %v665
  %v667 = vpop.xlane.xlu0 %666
  %v668 = vadd.f32 %v660, %v667
  %v669 = vmul.f32 %v668, 0.001953125
  %v670 = vadd.f32 %v669, 1e-05
  %v671 = vrsqrt.pop %v670
  %v672 = vmul.f32 %v671, %v670
  %v673 = vmul.f32 %v672, %v671
  %v674 = vmul.f32 0.5, %v673
  %v675 = vsub.f32 1.5, %v674
  %v676 = vmul.f32 %v671, %v675
  %vm677 = vweird.f32 %v670
  %vm678 = vweird.f32 %v671
  %vm679 = vmor %vm677, %vm678
  %v680 = vsel %vm679, %v671, %v676
  %v681 = vmul.f32 %v21, %v680
  %683 = vset.pattern.permute.xlu0 2
  %684 = vperm.xlu0 %683, %v681
  %v685 = vpop.permute.xlu0 %684
  %v687 = vmul.f32 %v649, %v685
  %v688 = vmul.f32 %v650, %v685
  %690 = vset.pattern.permute.xlu0 3
  %691 = vperm.xlu0 %690, %v21
  %v692 = vpop.permute.xlu0 %691
  %v694 = vadd.f32 %v687, %v692
  %v695 = vadd.f32 %v688, %v692
  %v696 = vmul.f32 %v651, %v685
  %v697 = vmul.f32 %v652, %v685
  %v698 = vadd.f32 %v696, %v692
  %v699 = vadd.f32 %v697, %v692
  %v700 = vld [vmem:[%s0] sm:$0xf]
  %v701 = vld [vmem:[%s0 + $0x8] sm:$0xf]
  %v702 = vadd.f32 %v694, %v700
  %v703 = vadd.f32 %v695, %v701
  %v704 = vmax.f32 %v702, 0.0
  %v705 = vmax.f32 %v703, 0.0
  %v708 = vrot.slane %v705, 4
  %v709 = vsel %vm219, %v704, %v708
  %711 = vst [vmem:[%s4] sm:$0xff] %v709
  %v712 = vld [vmem:[%s252] sm:$0xf]
  %v713 = vld [vmem:[%s252 + $0x8] sm:$0xf]
  %v714 = vadd.f32 %v698, %v712
  %v715 = vadd.f32 %v699, %v713
  %v716 = vmax.f32 %v714, 0.0
  %v717 = vmax.f32 %v715, 0.0
  %v720 = vrot.slane %v717, 4
  %v721 = vsel %vm219, %v716, %v720
  %s723 = scalar_lea.vmem %s4, 8
  %724 = vst [vmem:[%s723] sm:$0xff] %v721
  // Predicated region
  $region18: #{residual_block.1} parent=0 // pred_check
    _
  $region19: #{residual_block.1} parent=0 // pred_check_branch
    %726 = sbr.rel (0) target = $region21
  $region20: #{residual_block.1} parent=0 // pred_region
    _
  $region21: #{residual_block.1} parent=0 // pred_fallthru
    _
  // Predicated region
  $region22: #{residual_block.1} parent=0 // pred_check
    _
  $region23: #{residual_block.1} parent=0 // pred_check_branch
    %728 = sbr.rel (0) target = $region25
  $region24: #{residual_block.1} parent=0 // pred_region
    _
  $region25: #{residual_block.1} parent=0 // pred_fallthru
    _

</llo_original>
